<compile_context>
chip_gen: v5e
topology: v5e:2x2
jax: 0.10.0
libtpu: 0.0.40
codegen_flags: <defaults>
</compile_context>

<pallas_src>
import functools

import numpy as np

import jax
import jax.numpy as jnp
from jax.experimental import pallas as pl
from jax.experimental.pallas import tpu as pltpu


_LANE = 128        # pad feature dims to this (lane-dense, unmasked stores, full MXU cols)
_SUBLANE = 8       # pad / tile the row dim to this
_MAX_TILE_ROWS = 2048   # absolute row-tile cap (per perf review: 1024-2048 amortizes best)
_MIN_SPLIT_ROWS = 256   # only force >=2 grid steps when each half still has >=128 rows


def _round_up(x, m):
    return ((x + m - 1) // m) * m


def _cdiv(a, b):
    return (a + b - 1) // b


def _vmem_capacity_bytes():
    """Physical per-core VMEM; conservative v7x default if the query is unavailable."""
    try:
        return int(pltpu.get_tpu_info().vmem_capacity_bytes)
    except Exception:
        return 64 * 1024 * 1024


def _fused_mlp_kernel(*refs, num_layers, negative_slope):
    """Fused multi-layer y = leaky_relu(x @ W_l + b_l) for l = 0..L-1.

    refs = (x_ref, w0_ref, b0_ref, w1_ref, b1_ref, ..., o_ref)
    All intermediate activations live in vregs/VMEM; only the last layer is stored.
    """
    x_ref = refs[0]
    o_ref = refs[-1]

    h = x_ref[...]  # bf16 tile (TILE_N, Din_pad)
    for l in range(num_layers):
        w_ref = refs[1 + 2 * l]
        b_ref = refs[2 + 2 * l]
        # MXU matmul with f32 accumulation.
        y = jnp.dot(h, w_ref[...], preferred_element_type=jnp.float32)
        # Bias add + LeakyReLU on the f32 accumulator (VPU filler under the MXU).
        y = y + b_ref[...]
        y = jnp.maximum(y, negative_slope * y)  # LeakyReLU for 0 <= slope < 1
        if l < num_layers - 1:
            h = y.astype(w_ref.dtype)  # back to bf16 for the next MXU pass
        else:
            o_ref[...] = y.astype(o_ref.dtype)  # bf16 writeback (halved HBM writes)
    # Dropout: identity at inference.


def _fused_critic_forward(x_padded, params_padded, *, negative_slope, tile_n,
                          out_dtype, vmem_limit_bytes, single_buffer_weights):
    """x_padded: (N_pad, Din_pad) bf16; params_padded: [(W_pad bf16, b_pad f32), ...]."""
    n_pad, din_pad = x_padded.shape
    num_layers = len(params_padded)
    dout_pad = params_padded[-1][0].shape[1]

    kernel = functools.partial(
        _fused_mlp_kernel, num_layers=num_layers, negative_slope=negative_slope
    )

    def resident_spec(shape):
        # Grid-invariant operand (constant index_map): fetched once; request a single
        # buffer so it is not double-buffered in VMEM.
        if single_buffer_weights:
            return pl.BlockSpec(shape, lambda i: (0, 0), pipeline_mode=pl.Buffered(1))
        return pl.BlockSpec(shape, lambda i: (0, 0))

    in_specs = [pl.BlockSpec((tile_n, din_pad), lambda i: (i, 0))]
    flat_inputs = [x_padded]
    flops = 0
    bytes_accessed = x_padded.size * x_padded.dtype.itemsize
    for (w, b) in params_padded:
        in_specs.append(resident_spec(w.shape))
        in_specs.append(resident_spec(b.shape))
        flat_inputs.extend([w, b])
        flops += 2 * n_pad * w.shape[0] * w.shape[1]
        bytes_accessed += w.size * w.dtype.itemsize + b.size * b.dtype.itemsize
    bytes_accessed += n_pad * dout_pad * np.dtype(out_dtype).itemsize

    return pl.pallas_call(
        kernel,
        out_shape=jax.ShapeDtypeStruct((n_pad, dout_pad), out_dtype),
        grid=(n_pad // tile_n,),
        in_specs=in_specs,
        out_specs=pl.BlockSpec((tile_n, dout_pad), lambda i: (i, 0)),
        compiler_params=pltpu.CompilerParams(
            dimension_semantics=("parallel",),
            vmem_limit_bytes=vmem_limit_bytes,
        ),
        cost_estimate=pl.CostEstimate(
            flops=flops, transcendentals=0, bytes_accessed=bytes_accessed
        ),
    )(*flat_inputs)


class CriticPallas:
    """JAX/Pallas port of synd.models.critic.Critic (forward pass, eval mode)."""

    def __init__(self, input_dim, critic_dims, *, negative_slope=0.2,
                 dropout=0.5, pac=10, out_dtype=jnp.bfloat16, key=None):
        self._input_dim = input_dim
        self._critic_dims = tuple(critic_dims)
        self._negative_slope = negative_slope
        self._dropout = dropout  # identity in eval mode
        self._pac = pac
        self._out_dtype = out_dtype            # kernel writeback dtype (bf16 = half the writes)
        self._single_buffer_weights = True     # flipped off if this build rejects Buffered(1)

        if key is None:
            key = jax.random.PRNGKey(0)

        dims = [input_dim * pac] + list(critic_dims)
        dims_pad = [_round_up(d, _LANE) for d in dims]
        self._dims_pad = dims_pad
        self._din_pack = dims[0]
        self._din_pad = dims_pad[0]

        # Unpadded f32 params (reference / checkpoint-loading layout: W is (in, out)).
        self.params_f32 = []
        # Padded, bf16-weight params actually fed to the kernel.
        self.params_padded = []
        for (in_dim, out_dim), (in_pad, out_pad) in zip(
            zip(dims[:-1], dims[1:]), zip(dims_pad[:-1], dims_pad[1:])
        ):
            key, wk, bk = jax.random.split(key, 3)
            # Deterministic init mimicking torch.nn.Linear's uniform(-1/sqrt(in), 1/sqrt(in)).
            bound = 1.0 / (in_dim ** 0.5)
            w = jax.random.uniform(wk, (in_dim, out_dim), jnp.float32, -bound, bound)
            b = jax.random.uniform(bk, (1, out_dim), jnp.float32, -bound, bound)
            self.params_f32.append((w, b))

            w_pad = jnp.zeros((in_pad, out_pad), jnp.float32).at[:in_dim, :out_dim].set(w)
            b_pad = jnp.zeros((1, out_pad), jnp.float32).at[:, :out_dim].set(b)
            self.params_padded.append((w_pad.astype(jnp.bfloat16), b_pad))

        self._weight_bytes = sum(
            w.size * w.dtype.itemsize + b.size * b.dtype.itemsize
            for (w, b) in self.params_padded
        )
        self._vmem_capacity = _vmem_capacity_bytes()

        # Residency guard: all padded weights live in VMEM for the whole grid.  Use the
        # worst case (double-buffered) so a config that fits v5e/v6e cannot OOM v7x.
        assert 2 * self._weight_bytes <= self._vmem_capacity // 3, (
            "Padded critic weights too large to stay resident in VMEM "
            f"({self._weight_bytes} B vs capacity {self._vmem_capacity} B); "
            "a layer-/K-tiled variant is required."
        )

        self._tile_cap = self._derive_tile_cap()

    # ---- tiling / VMEM sizing -------------------------------------------------

    def _per_row_vmem_bytes(self):
        din_pad = self._dims_pad[0]
        dout_pad = self._dims_pad[-1]
        out_isz = np.dtype(self._out_dtype).itemsize
        return (
            2 * 2 * din_pad            # x tile, bf16, double-buffered
            + 2 * out_isz * dout_pad   # out tile, double-buffered
            + 6 * max(self._dims_pad)  # live f32 accumulator + bf16 h for the widest layer
        )

    def _derive_tile_cap(self):
        budget = int(0.6 * self._vmem_capacity) - 2 * self._weight_bytes
        cap = (budget // self._per_row_vmem_bytes()) // _SUBLANE * _SUBLANE
        return max(_SUBLANE, min(_MAX_TILE_ROWS, cap))

    def _choose_tiling(self, n):
        """Return (tile_n, n_pad) with n_pad % tile_n == 0 and minimal row padding."""
        n8 = _round_up(n, _SUBLANE)
        cap = self._tile_cap
        if n8 <= cap:
            # Mid-size batches: use >=2 grid steps so both v7x TensorCores get a share
            # of the "parallel" row axis; tiny batches stay a single step.
            if n8 >= _MIN_SPLIT_ROWS and n8 % (2 * _SUBLANE) == 0:
                return n8 // 2, n8
            return n8, n8
        # cdiv-balanced split: padding bounded by ~8*num_steps rows, never a full tile.
        num_steps = _cdiv(n8, cap)
        if num_steps % 2 == 1:
            num_steps += 1  # even step count shards evenly across 2 TCs on v7x
        tile_n = _round_up(_cdiv(n8, num_steps), _SUBLANE)
        return tile_n, tile_n * num_steps

    def _vmem_limit_bytes(self, tile_n):
        est = 2 * self._weight_bytes + tile_n * self._per_row_vmem_bytes()
        # Generous headroom for compiler temporaries; never above ~3/4 of physical VMEM
        # (48 MiB on v7x, ~96 MiB on v5e/v6e).
        return int(min(0.75 * self._vmem_capacity,
                       max(32 * 1024 * 1024, 4 * est + 16 * 1024 * 1024)))

    # ---- forward ---------------------------------------------------------------

    def __call__(self, x):
        assert x.shape[0] % self._pac == 0, (
            f"Batch size of input tensor must be divisible by the pac size. "
            f"Your shape is {x.shape}, and {x.shape[0]} is not divisible by {self._pac}."
        )
        # pac-reshape: (B, input_dim) -> (B // pac, input_dim * pac)
        h = x.reshape(-1, self._din_pack)
        n = h.shape[0]

        tile_n, n_pad = self._choose_tiling(n)

        # Single fused pad+cast pass: build the padded activation buffer directly in
        # bf16 (no intermediate f32 zero/pad/cast pass over the whole activation).
        h_pad = jnp.zeros((n_pad, self._din_pad), jnp.bfloat16)
        h_pad = h_pad.at[:n, : self._din_pack].set(h.astype(jnp.bfloat16))

        kwargs = dict(
            negative_slope=self._negative_slope,
            tile_n=tile_n,
            out_dtype=self._out_dtype,
            vmem_limit_bytes=self._vmem_limit_bytes(tile_n),
        )

        if self._single_buffer_weights:
            try:
                out_pad = _fused_critic_forward(
                    h_pad, self.params_padded, single_buffer_weights=True, **kwargs)
                return self._finish(out_pad, n)
            except Exception:
                # This jax/Mosaic build rejects pipeline_mode=Buffered(1); fall back to
                # default double-buffered resident weights (already budgeted for above).
                self._single_buffer_weights = False

        out_pad = _fused_critic_forward(
            h_pad, self.params_padded, single_buffer_weights=False, **kwargs)
        return self._finish(out_pad, n)

    def _finish(self, out_pad, n):
        # Slice off padded rows/lanes; return f32 for interface parity with the PyTorch
        # module (kernel writeback stays bf16; this cast only touches the valid slice).
        return out_pad[:n, : self._critic_dims[-1]].astype(jnp.float32)


def _reference_forward(critic, x):
    """Pure-JAX reference mirroring the kernel's numerics (bf16 matmul, f32 accumulate)."""
    h = x.reshape(-1, critic._input_dim * critic._pac)
    for (w, b) in critic.params_f32:
        y = jnp.dot(
            h.astype(jnp.bfloat16), w.astype(jnp.bfloat16),
            preferred_element_type=jnp.float32,
        ) + b
        h = jnp.maximum(y, critic._negative_slope * y)
    return h


if __name__ == "__main__":
    key = jax.random.PRNGKey(0)
    k_param, k_x = jax.random.split(key)

    input_dim = 16
    critic_dims = (64, 32)
    pac = 10
    batch = 20  # divisible by pac -> packed rows = 2

    critic = CriticPallas(input_dim, critic_dims, pac=pac, key=k_param)

    x = jax.random.normal(k_x, (batch, input_dim), dtype=jnp.float32)

    out = critic(x)
    out = jax.block_until_ready(out)

    ref = _reference_forward(critic, x)
    assert out.shape == (batch // pac, critic_dims[-1]), out.shape
    # Tolerance covers the bf16 output writeback rounding on top of bf16-input matmuls.
    assert jnp.allclose(out, ref, atol=1e-2, rtol=1e-2), "mismatch vs JAX reference"

    print("KERNEL_OK")
</pallas_src>

<mosaic_0001>
module attributes {stable_mosaic.version = 11 : i64} {
  func.func @_fused_mlp_kernel(%arg0: i32, %arg1: memref<8x256xbf16, #tpu.memory_space<vmem>>, %arg2: memref<256x128xbf16, #tpu.memory_space<vmem>>, %arg3: memref<1x128xf32, #tpu.memory_space<vmem>>, %arg4: memref<128x128xbf16, #tpu.memory_space<vmem>>, %arg5: memref<1x128xf32, #tpu.memory_space<vmem>>, %arg6: memref<8x128xbf16, #tpu.memory_space<vmem>>) attributes {dimension_semantics = [#tpu.dimension_semantics<parallel>], iteration_bounds = array<i64: 1>, scalar_prefetch = 0 : i64, scratch_operands = 0 : i64, tpu.core_type = #tpu.core_type<tc>, window_params = [{transform_indices = @transform_0, window_bounds = array<i64: 8, 256>}, {pipeline_mode = #tpu.pipeline_mode<synchronous>, transform_indices = @transform_1, window_bounds = array<i64: 256, 128>}, {pipeline_mode = #tpu.pipeline_mode<synchronous>, transform_indices = @transform_2, window_bounds = array<i64: 1, 128>}, {pipeline_mode = #tpu.pipeline_mode<synchronous>, transform_indices = @transform_3, window_bounds = array<i64: 128, 128>}, {pipeline_mode = #tpu.pipeline_mode<synchronous>, transform_indices = @transform_4, window_bounds = array<i64: 1, 128>}, {transform_indices = @transform_5, window_bounds = array<i64: 8, 128>}]} {
    %c0 = arith.constant 0 : index
    %c0_0 = arith.constant 0 : index
    %0 = vector.load %arg1[%c0, %c0_0] : memref<8x256xbf16, #tpu.memory_space<vmem>>, vector<8x256xbf16>
    %c0_1 = arith.constant 0 : index
    %c0_2 = arith.constant 0 : index
    %1 = vector.load %arg2[%c0_1, %c0_2] : memref<256x128xbf16, #tpu.memory_space<vmem>>, vector<256x128xbf16>
    %cst = arith.constant dense<0.000000e+00> : vector<8x128xf32>
    %2 = tpu.matmul %0, %1, %cst {dimension_numbers = #tpu.dot_dimension_numbers<[1], [0], [0], [1], [0, 0, 1, 1], [], []>} : vector<8x256xbf16>, vector<256x128xbf16>, vector<8x128xf32> -> vector<8x128xf32>
    %c0_3 = arith.constant 0 : index
    %c0_4 = arith.constant 0 : index
    %3 = vector.load %arg3[%c0_3, %c0_4] : memref<1x128xf32, #tpu.memory_space<vmem>>, vector<1x128xf32>
    %4 = vector.broadcast %3 : vector<1x128xf32> to vector<8x128xf32>
    %5 = arith.addf %2, %4 : vector<8x128xf32>
    %cst_5 = arith.constant 2.000000e-01 : f32
    %6 = vector.broadcast %cst_5 : f32 to vector<8x128xf32>
    %7 = arith.mulf %6, %5 : vector<8x128xf32>
    %8 = arith.maximumf %5, %7 : vector<8x128xf32>
    %9 = arith.truncf %8 : vector<8x128xf32> to vector<8x128xbf16>
    %c0_6 = arith.constant 0 : index
    %c0_7 = arith.constant 0 : index
    %10 = vector.load %arg4[%c0_6, %c0_7] : memref<128x128xbf16, #tpu.memory_space<vmem>>, vector<128x128xbf16>
    %cst_8 = arith.constant dense<0.000000e+00> : vector<8x128xf32>
    %11 = tpu.matmul %9, %10, %cst_8 {dimension_numbers = #tpu.dot_dimension_numbers<[1], [0], [0], [1], [0, 0, 1, 1], [], []>} : vector<8x128xbf16>, vector<128x128xbf16>, vector<8x128xf32> -> vector<8x128xf32>
    %c0_9 = arith.constant 0 : index
    %c0_10 = arith.constant 0 : index
    %12 = vector.load %arg5[%c0_9, %c0_10] : memref<1x128xf32, #tpu.memory_space<vmem>>, vector<1x128xf32>
    %13 = vector.broadcast %12 : vector<1x128xf32> to vector<8x128xf32>
    %14 = arith.addf %11, %13 : vector<8x128xf32>
    %cst_11 = arith.constant 2.000000e-01 : f32
    %15 = vector.broadcast %cst_11 : f32 to vector<8x128xf32>
    %16 = arith.mulf %15, %14 : vector<8x128xf32>
    %17 = arith.maximumf %14, %16 : vector<8x128xf32>
    %18 = arith.truncf %17 : vector<8x128xf32> to vector<8x128xbf16>
    %c0_12 = arith.constant 0 : index
    %c0_13 = arith.constant 0 : index
    %19 = vector.load %arg6[%c0_12, %c0_13] : memref<8x128xbf16, #tpu.memory_space<vmem>>, vector<8x128xbf16>
    tpu.vector_store %arg6[%c0_12, %c0_13], %18 {strides = array<i32>} : memref<8x128xbf16, #tpu.memory_space<vmem>>, vector<8x128xbf16>,
    return
  }
  func.func @transform_0(%arg0: i32) -> (i32, i32) {
    %c0_i32 = arith.constant 0 : i32
    %c0_i32_0 = arith.constant 0 : i32
    return %arg0, %c0_i32 : i32, i32
  }
  func.func @transform_1(%arg0: i32) -> (i32, i32) {
    %c0_i32 = arith.constant 0 : i32
    %c0_i32_0 = arith.constant 0 : i32
    %c0_i32_1 = arith.constant 0 : i32
    return %c0_i32, %c0_i32_0 : i32, i32
  }
  func.func @transform_2(%arg0: i32) -> (i32, i32) {
    %c0_i32 = arith.constant 0 : i32
    %c0_i32_0 = arith.constant 0 : i32
    %c0_i32_1 = arith.constant 0 : i32
    return %c0_i32, %c0_i32_0 : i32, i32
  }
  func.func @transform_3(%arg0: i32) -> (i32, i32) {
    %c0_i32 = arith.constant 0 : i32
    %c0_i32_0 = arith.constant 0 : i32
    %c0_i32_1 = arith.constant 0 : i32
    return %c0_i32, %c0_i32_0 : i32, i32
  }
  func.func @transform_4(%arg0: i32) -> (i32, i32) {
    %c0_i32 = arith.constant 0 : i32
    %c0_i32_0 = arith.constant 0 : i32
    %c0_i32_1 = arith.constant 0 : i32
    return %c0_i32, %c0_i32_0 : i32, i32
  }
  func.func @transform_5(%arg0: i32) -> (i32, i32) {
    %c0_i32 = arith.constant 0 : i32
    %c0_i32_0 = arith.constant 0 : i32
    return %arg0, %c0_i32 : i32, i32
  }
}

module attributes {stable_mosaic.version = 11 : i64} {
  func.func @_fused_mlp_kernel(%arg0: i32, %arg1: memref<8x256xbf16, #tpu.memory_space<vmem>>, %arg2: memref<256x128xbf16, #tpu.memory_space<vmem>>, %arg3: memref<1x128xf32, #tpu.memory_space<vmem>>, %arg4: memref<128x128xbf16, #tpu.memory_space<vmem>>, %arg5: memref<1x128xf32, #tpu.memory_space<vmem>>, %arg6: memref<8x128xbf16, #tpu.memory_space<vmem>>) attributes {dimension_semantics = [#tpu.dimension_semantics<parallel>], iteration_bounds = array<i64: 1>, scalar_prefetch = 0 : i64, scratch_operands = 0 : i64, tpu.core_type = #tpu.core_type<tc>, window_params = [{transform_indices = @transform_0, window_bounds = array<i64: 8, 256>}, {pipeline_mode = #tpu.pipeline_mode<synchronous>, transform_indices = @transform_1, window_bounds = array<i64: 256, 128>}, {pipeline_mode = #tpu.pipeline_mode<synchronous>, transform_indices = @transform_2, window_bounds = array<i64: 1, 128>}, {pipeline_mode = #tpu.pipeline_mode<synchronous>, transform_indices = @transform_3, window_bounds = array<i64: 128, 128>}, {pipeline_mode = #tpu.pipeline_mode<synchronous>, transform_indices = @transform_4, window_bounds = array<i64: 1, 128>}, {transform_indices = @transform_5, window_bounds = array<i64: 8, 128>}]} {
    %c0 = arith.constant 0 : index
    %c0_0 = arith.constant 0 : index
    %0 = vector.load %arg1[%c0, %c0_0] : memref<8x256xbf16, #tpu.memory_space<vmem>>, vector<8x256xbf16>
    %c0_1 = arith.constant 0 : index
    %c0_2 = arith.constant 0 : index
    %1 = vector.load %arg2[%c0_1, %c0_2] : memref<256x128xbf16, #tpu.memory_space<vmem>>, vector<256x128xbf16>
    %cst = arith.constant dense<0.000000e+00> : vector<8x128xf32>
    %2 = tpu.matmul %0, %1, %cst {dimension_numbers = #tpu.dot_dimension_numbers<[1], [0], [0], [1], [0, 0, 1, 1], [], []>} : vector<8x256xbf16>, vector<256x128xbf16>, vector<8x128xf32> -> vector<8x128xf32>
    %c0_3 = arith.constant 0 : index
    %c0_4 = arith.constant 0 : index
    %3 = vector.load %arg3[%c0_3, %c0_4] : memref<1x128xf32, #tpu.memory_space<vmem>>, vector<1x128xf32>
    %4 = vector.broadcast %3 : vector<1x128xf32> to vector<8x128xf32>
    %5 = arith.addf %2, %4 : vector<8x128xf32>
    %cst_5 = arith.constant 2.000000e-01 : f32
    %6 = vector.broadcast %cst_5 : f32 to vector<8x128xf32>
    %7 = arith.mulf %6, %5 : vector<8x128xf32>
    %8 = arith.maximumf %5, %7 : vector<8x128xf32>
    %9 = arith.truncf %8 : vector<8x128xf32> to vector<8x128xbf16>
    %c0_6 = arith.constant 0 : index
    %c0_7 = arith.constant 0 : index
    %10 = vector.load %arg4[%c0_6, %c0_7] : memref<128x128xbf16, #tpu.memory_space<vmem>>, vector<128x128xbf16>
    %cst_8 = arith.constant dense<0.000000e+00> : vector<8x128xf32>
    %11 = tpu.matmul %9, %10, %cst_8 {dimension_numbers = #tpu.dot_dimension_numbers<[1], [0], [0], [1], [0, 0, 1, 1], [], []>} : vector<8x128xbf16>, vector<128x128xbf16>, vector<8x128xf32> -> vector<8x128xf32>
    %c0_9 = arith.constant 0 : index
    %c0_10 = arith.constant 0 : index
    %12 = vector.load %arg5[%c0_9, %c0_10] : memref<1x128xf32, #tpu.memory_space<vmem>>, vector<1x128xf32>
    %13 = vector.broadcast %12 : vector<1x128xf32> to vector<8x128xf32>
    %14 = arith.addf %11, %13 : vector<8x128xf32>
    %cst_11 = arith.constant 2.000000e-01 : f32
    %15 = vector.broadcast %cst_11 : f32 to vector<8x128xf32>
    %16 = arith.mulf %15, %14 : vector<8x128xf32>
    %17 = arith.maximumf %14, %16 : vector<8x128xf32>
    %18 = arith.truncf %17 : vector<8x128xf32> to vector<8x128xbf16>
    %c0_12 = arith.constant 0 : index
    %c0_13 = arith.constant 0 : index
    %19 = vector.load %arg6[%c0_12, %c0_13] : memref<8x128xbf16, #tpu.memory_space<vmem>>, vector<8x128xbf16>
    tpu.vector_store %arg6[%c0_12, %c0_13], %18 {strides = array<i32>} : memref<8x128xbf16, #tpu.memory_space<vmem>>, vector<8x128xbf16>,
    return
  }
  func.func @transform_0(%arg0: i32) -> (i32, i32) {
    %c0_i32 = arith.constant 0 : i32
    %c0_i32_0 = arith.constant 0 : i32
    return %arg0, %c0_i32 : i32, i32
  }
  func.func @transform_1(%arg0: i32) -> (i32, i32) {
    %c0_i32 = arith.constant 0 : i32
    %c0_i32_0 = arith.constant 0 : i32
    %c0_i32_1 = arith.constant 0 : i32
    return %c0_i32, %c0_i32_0 : i32, i32
  }
  func.func @transform_2(%arg0: i32) -> (i32, i32) {
    %c0_i32 = arith.constant 0 : i32
    %c0_i32_0 = arith.constant 0 : i32
    %c0_i32_1 = arith.constant 0 : i32
    return %c0_i32, %c0_i32_0 : i32, i32
  }
  func.func @transform_3(%arg0: i32) -> (i32, i32) {
    %c0_i32 = arith.constant 0 : i32
    %c0_i32_0 = arith.constant 0 : i32
    %c0_i32_1 = arith.constant 0 : i32
    return %c0_i32, %c0_i32_0 : i32, i32
  }
  func.func @transform_4(%arg0: i32) -> (i32, i32) {
    %c0_i32 = arith.constant 0 : i32
    %c0_i32_0 = arith.constant 0 : i32
    %c0_i32_1 = arith.constant 0 : i32
    return %c0_i32, %c0_i32_0 : i32, i32
  }
  func.func @transform_5(%arg0: i32) -> (i32, i32) {
    %c0_i32 = arith.constant 0 : i32
    %c0_i32_0 = arith.constant 0 : i32
    return %arg0, %c0_i32 : i32, i32
  }
}

</mosaic_0001>

<llo_original>
// kernel: tpu_custom_call.1
$region0: #{tpu_custom_call.1}
  #allocation0 [shape = 'u32[]', space=smem, size = 0x4, offset = 0x4, fixed_abs, tag = 'smem constant byte address 0x4 - core index']
  #allocation1 [shape = 'u32[72,128]{1,0:T(1,128)}', space=vmem, size = 0x9000, scoped, tag = 'internal scratch']
  %s0 = inlined_call_operand.hbm [shape: bf16[8,256], index: 0, kind: input, shape index: {}]
  %s1 = inlined_call_operand.hbm [shape: bf16[256,128], index: 1, kind: input, shape index: {}]
  %s2 = inlined_call_operand.vmem [shape: f32[1,128], index: 2, kind: input, shape index: {}]
  %s3 = inlined_call_operand.hbm [shape: bf16[128,128], index: 3, kind: input, shape index: {}]
  %s4 = inlined_call_operand.vmem [shape: f32[1,128], index: 4, kind: input, shape index: {}]
  %s5 = inlined_call_operand.hbm [shape: bf16[8,128], index: 5, kind: output, shape index: {}]
  %s6 = sld [smem:[#allocation0]]
  $region42: #{tpu_custom_call.1} parent=0
    _
  %s8 = ssub.s32 1, %s6
  %s9 = scalar_select 0, %s8, %s6
  $region1: #{tpu_custom_call.1} parent=0
    #allocation2 [shape = 'u8[4096]{0}', space=vmem, size = 0x1000, scoped, tag = 'input window, operand 0, single buffered']
    #allocation3 [shape = 's32[1]{0}', space=sflag, size = 0x4, scoped, tag = 'scoped memory for tpu_custom_call.1']
    #allocation4 [shape = 's32[1]{0}', space=sflag, size = 0x4, scoped, tag = 'scoped memory for tpu_custom_call.1']
    #allocation5 [shape = 'u8[65536]{0}', space=vmem, size = 0x10000, scoped, tag = 'input window, operand 1, single buffered']
    #allocation6 [shape = 's32[1]{0}', space=sflag, size = 0x4, scoped, tag = 'scoped memory for tpu_custom_call.1']
    #allocation7 [shape = 'u8[32768]{0}', space=vmem, size = 0x8000, scoped, tag = 'input window, operand 3, single buffered']
    #allocation8 [shape = 'u8[2048]{0}', space=vmem, size = 0x800, scoped, tag = 'output window, operand 0, single buffered']
    %10 = vsyncpa [#allocation3], 0
    %11 = vsyncpa [#allocation6], 0
    %12 = vsyncpa [#allocation4], 0
    // Predicated region
    $region2: #{tpu_custom_call.1} parent=1 // pred_check
      _
    $region3: #{tpu_custom_call.1} parent=1 // pred_check_branch
      %14 = sbr.rel (0) target = $region5
    $region4: #{tpu_custom_call.1} parent=1 // pred_region
      %16 = vsyncadd [#allocation3], 0
      %s18 = sshll.u32 %s0, 4
      %s19 = int_to_ptr.hbm [resolvable:$true] %s18
      %s20 = sshll.u32 [#allocation2], 4
      %s21 = int_to_ptr.vmem [resolvable:$true] %s20
      %23 = dma.hbm_to_vmem [thread:$0]  %s19, 128, %s21, [#allocation3]
    $region5: #{tpu_custom_call.1} parent=1 // pred_fallthru
      _
    // Predicated region
    $region6: #{tpu_custom_call.1} parent=1 // pred_check
      _
    $region7: #{tpu_custom_call.1} parent=1 // pred_check_branch
      %25 = sbr.rel (0) target = $region9
    $region8: #{tpu_custom_call.1} parent=1 // pred_region
      %27 = vsyncadd [#allocation6], 0
      %s28 = sshll.u32 %s1, 4
      %s29 = int_to_ptr.hbm [resolvable:$true] %s28
      %s30 = sshll.u32 [#allocation5], 4
      %s31 = int_to_ptr.vmem [resolvable:$true] %s30
      %36 = dma.hbm_to_vmem [thread:$0]  %s29, 2048, %s31, [#allocation6], 64, 64, 4
    $region9: #{tpu_custom_call.1} parent=1 // pred_fallthru
      _
    // Predicated region
    $region10: #{tpu_custom_call.1} parent=1 // pred_check
      _
    $region11: #{tpu_custom_call.1} parent=1 // pred_check_branch
      %38 = sbr.rel (0) target = $region13
    $region12: #{tpu_custom_call.1} parent=1 // pred_region
      _
    $region13: #{tpu_custom_call.1} parent=1 // pred_fallthru
      _
    // Predicated region
    $region14: #{tpu_custom_call.1} parent=1 // pred_check
      _
    $region15: #{tpu_custom_call.1} parent=1 // pred_check_branch
      %40 = sbr.rel (0) target = $region17
    $region16: #{tpu_custom_call.1} parent=1 // pred_region
      %42 = vsyncadd [#allocation6], 0
      %s43 = sshll.u32 %s3, 4
      %s44 = int_to_ptr.hbm [resolvable:$true] %s43
      %s45 = sshll.u32 [#allocation7], 4
      %s46 = int_to_ptr.vmem [resolvable:$true] %s45
      %51 = dma.hbm_to_vmem [thread:$0]  %s44, 1024, %s46, [#allocation6], 64, 64, 4
    $region17: #{tpu_custom_call.1} parent=1 // pred_fallthru
      _
    // Predicated region
    $region18: #{tpu_custom_call.1} parent=1 // pred_check
      _
    $region19: #{tpu_custom_call.1} parent=1 // pred_check_branch
      %53 = sbr.rel (0) target = $region21
    $region20: #{tpu_custom_call.1} parent=1 // pred_region
      _
    $region21: #{tpu_custom_call.1} parent=1 // pred_fallthru
      _
    // Predicated region
    $region22: #{tpu_custom_call.1} parent=1 // pred_check
      _
    $region23: #{tpu_custom_call.1} parent=1 // pred_check_branch
      %55 = sbr.rel (0) target = $region25
    $region24: #{tpu_custom_call.1} parent=1 // pred_region
      %57 = dma.done [#allocation3], 128
    $region25: #{tpu_custom_call.1} parent=1 // pred_fallthru
      _
    // Predicated region
    $region26: #{tpu_custom_call.1} parent=1 // pred_check
      _
    $region27: #{tpu_custom_call.1} parent=1 // pred_check_branch
      %59 = sbr.rel (0) target = $region29
    $region28: #{tpu_custom_call.1} parent=1 // pred_region
      %61 = dma.done [#allocation6], 2048
    $region29: #{tpu_custom_call.1} parent=1 // pred_fallthru
      _
    // Predicated region
    $region30: #{tpu_custom_call.1} parent=1 // pred_check
      _
    $region31: #{tpu_custom_call.1} parent=1 // pred_check_branch
      %63 = sbr.rel (0) target = $region33
    $region32: #{tpu_custom_call.1} parent=1 // pred_region
      %65 = dma.done [#allocation6], 1024
    $region33: #{tpu_custom_call.1} parent=1 // pred_fallthru
      _
    %v66 = vld [vmem:[#allocation2] sm:$0xff]
    %v67 = vld [vmem:[#allocation5] sm:$0xf]
    %v68 = vld [vmem:[#allocation5 + $0x4] sm:$0xf]
    %v69 = vld [vmem:[#allocation5 + $0x8] sm:$0xf]
    %v70 = vld [vmem:[#allocation5 + $0xc] sm:$0xf]
    %v71 = vld [vmem:[#allocation5 + $0x10] sm:$0xf]
    %v72 = vld [vmem:[#allocation5 + $0x14] sm:$0xf]
    %v73 = vld [vmem:[#allocation5 + $0x18] sm:$0xf]
    %v74 = vld [vmem:[#allocation5 + $0x1c] sm:$0xf]
    %v75 = vld [vmem:[#allocation5 + $0x20] sm:$0xf]
    %v76 = vld [vmem:[#allocation5 + $0x24] sm:$0xf]
    %v77 = vld [vmem:[#allocation5 + $0x28] sm:$0xf]
    %v78 = vld [vmem:[#allocation5 + $0x2c] sm:$0xf]
    %v79 = vld [vmem:[#allocation5 + $0x30] sm:$0xf]
    %v80 = vld [vmem:[#allocation5 + $0x34] sm:$0xf]
    %v81 = vld [vmem:[#allocation5 + $0x38] sm:$0xf]
    %v82 = vld [vmem:[#allocation5 + $0x3c] sm:$0xf]
    %v83 = vld [vmem:[#allocation5 + $0x40] sm:$0xf]
    %v84 = vld [vmem:[#allocation5 + $0x44] sm:$0xf]
    %v85 = vld [vmem:[#allocation5 + $0x48] sm:$0xf]
    %v86 = vld [vmem:[#allocation5 + $0x4c] sm:$0xf]
    %v87 = vld [vmem:[#allocation5 + $0x50] sm:$0xf]
    %v88 = vld [vmem:[#allocation5 + $0x54] sm:$0xf]
    %v89 = vld [vmem:[#allocation5 + $0x58] sm:$0xf]
    %v90 = vld [vmem:[#allocation5 + $0x5c] sm:$0xf]
    %v91 = vld [vmem:[#allocation5 + $0x60] sm:$0xf]
    %v92 = vld [vmem:[#allocation5 + $0x64] sm:$0xf]
    %v93 = vld [vmem:[#allocation5 + $0x68] sm:$0xf]
    %v94 = vld [vmem:[#allocation5 + $0x6c] sm:$0xf]
    %v95 = vld [vmem:[#allocation5 + $0x70] sm:$0xf]
    %v96 = vld [vmem:[#allocation5 + $0x74] sm:$0xf]
    %v97 = vld [vmem:[#allocation5 + $0x78] sm:$0xf]
    %v98 = vld [vmem:[#allocation5 + $0x7c] sm:$0xf]
    %v99 = vld [vmem:[%s2] sm:$0x1]
    %v101 = vperm.slane %v99, 0
    %v104 = vunpack.c.l.b16 %v66
    %v105 = vunpack.c.h.b16 %v66
    %v106 = vpack.c.b16 %v104, %v104
    %v107 = vpack.c.b16 %v105, %v105
    %v142 = vunpack.c.l.b16 %v67
    %v143 = vunpack.c.l.b16 %v68
    %v144 = vunpack.c.l.b16 %v69
    %v145 = vunpack.c.l.b16 %v70
    %v146 = vunpack.c.l.b16 %v71
    %v147 = vunpack.c.l.b16 %v72
    %v148 = vunpack.c.l.b16 %v73
    %v149 = vunpack.c.l.b16 %v74
    %v150 = vunpack.c.l.b16 %v75
    %v151 = vunpack.c.l.b16 %v76
    %v152 = vunpack.c.l.b16 %v77
    %v153 = vunpack.c.l.b16 %v78
    %v154 = vunpack.c.l.b16 %v79
    %v155 = vunpack.c.l.b16 %v80
    %v156 = vunpack.c.l.b16 %v81
    %v157 = vunpack.c.l.b16 %v82
    %v158 = vunpack.c.l.b16 %v83
    %v159 = vunpack.c.l.b16 %v84
    %v160 = vunpack.c.l.b16 %v85
    %v161 = vunpack.c.l.b16 %v86
    %v162 = vunpack.c.l.b16 %v87
    %v163 = vunpack.c.l.b16 %v88
    %v164 = vunpack.c.l.b16 %v89
    %v165 = vunpack.c.l.b16 %v90
    %v166 = vunpack.c.l.b16 %v91
    %v167 = vunpack.c.l.b16 %v92
    %v168 = vunpack.c.l.b16 %v93
    %v169 = vunpack.c.l.b16 %v94
    %v170 = vunpack.c.l.b16 %v95
    %v171 = vunpack.c.l.b16 %v96
    %v172 = vunpack.c.l.b16 %v97
    %v173 = vunpack.c.l.b16 %v98
    %v174 = vpack.c.b16 %v143, %v142
    %v175 = vpack.c.b16 %v145, %v144
    %v176 = vpack.c.b16 %v147, %v146
    %v177 = vpack.c.b16 %v149, %v148
    %v178 = vpack.c.b16 %v151, %v150
    %v179 = vpack.c.b16 %v153, %v152
    %v180 = vpack.c.b16 %v155, %v154
    %v181 = vpack.c.b16 %v157, %v156
    %v182 = vpack.c.b16 %v159, %v158
    %v183 = vpack.c.b16 %v161, %v160
    %v184 = vpack.c.b16 %v163, %v162
    %v185 = vpack.c.b16 %v165, %v164
    %v186 = vpack.c.b16 %v167, %v166
    %v187 = vpack.c.b16 %v169, %v168
    %v188 = vpack.c.b16 %v171, %v170
    %v189 = vpack.c.b16 %v173, %v172
    %206 = vmatpush.bf16.msra.mxu0 %v181
    %207 = vmatpush.bf16.msra.mxu0 %v180
    %208 = vmatpush.bf16.msra.mxu0 %v179
    %209 = vmatpush.bf16.msra.mxu0 %v178
    %210 = vmatpush.bf16.msra.mxu0 %v177
    %211 = vmatpush.bf16.msra.mxu0 %v176
    %212 = vmatpush.bf16.msra.mxu0 %v175
    %213 = vmatpush.bf16.msra.mxu0 %v174
    %214 = vmatmul.bf16.gmra.mxu0 %v106
    %v215 = vpop.f32.mrf.mxu0
    %v216 = vadd.f32 %v101, %v215
    %v217 = vpop.f32.mrf.mxu0
    %218 = vdwg.mxu0
    %219 = vmatpush.bf16.msra.mxu0 %v189
    %220 = vmatpush.bf16.msra.mxu0 %v188
    %221 = vmatpush.bf16.msra.mxu0 %v187
    %222 = vmatpush.bf16.msra.mxu0 %v186
    %223 = vmatpush.bf16.msra.mxu0 %v185
    %224 = vmatpush.bf16.msra.mxu0 %v184
    %225 = vmatpush.bf16.msra.mxu0 %v183
    %226 = vmatpush.bf16.msra.mxu0 %v182
    %227 = vmatmul.bf16.gmra.mxu0 %v107
    %v228 = vpop.f32.mrf.mxu0
    %v229 = vadd.f32 %v216, %v228
    %v230 = vpop.f32.mrf.mxu0
    %231 = vdwg.mxu0
    %v232 = vmul.f32 %v229, 0.2
    %v233 = vmax.f32 %v229, %v232
    %v234 = vpack.c.bf16 %v233, %v233
    %v235 = vld [vmem:[#allocation7] sm:$0xf]
    %v236 = vld [vmem:[#allocation7 + $0x4] sm:$0xf]
    %v237 = vld [vmem:[#allocation7 + $0x8] sm:$0xf]
    %v238 = vld [vmem:[#allocation7 + $0xc] sm:$0xf]
    %v239 = vld [vmem:[#allocation7 + $0x10] sm:$0xf]
    %v240 = vld [vmem:[#allocation7 + $0x14] sm:$0xf]
    %v241 = vld [vmem:[#allocation7 + $0x18] sm:$0xf]
    %v242 = vld [vmem:[#allocation7 + $0x1c] sm:$0xf]
    %v243 = vld [vmem:[#allocation7 + $0x20] sm:$0xf]
    %v244 = vld [vmem:[#allocation7 + $0x24] sm:$0xf]
    %v245 = vld [vmem:[#allocation7 + $0x28] sm:$0xf]
    %v246 = vld [vmem:[#allocation7 + $0x2c] sm:$0xf]
    %v247 = vld [vmem:[#allocation7 + $0x30] sm:$0xf]
    %v248 = vld [vmem:[#allocation7 + $0x34] sm:$0xf]
    %v249 = vld [vmem:[#allocation7 + $0x38] sm:$0xf]
    %v250 = vld [vmem:[#allocation7 + $0x3c] sm:$0xf]
    %v251 = vld [vmem:[%s4] sm:$0x1]
    %v253 = vperm.slane %v251, 0
    %v271 = vunpack.c.l.b16 %v235
    %v272 = vunpack.c.l.b16 %v236
    %v273 = vunpack.c.l.b16 %v237
    %v274 = vunpack.c.l.b16 %v238
    %v275 = vunpack.c.l.b16 %v239
    %v276 = vunpack.c.l.b16 %v240
    %v277 = vunpack.c.l.b16 %v241
    %v278 = vunpack.c.l.b16 %v242
    %v279 = vunpack.c.l.b16 %v243
    %v280 = vunpack.c.l.b16 %v244
    %v281 = vunpack.c.l.b16 %v245
    %v282 = vunpack.c.l.b16 %v246
    %v283 = vunpack.c.l.b16 %v247
    %v284 = vunpack.c.l.b16 %v248
    %v285 = vunpack.c.l.b16 %v249
    %v286 = vunpack.c.l.b16 %v250
    %v287 = vpack.c.b16 %v272, %v271
    %v288 = vpack.c.b16 %v274, %v273
    %v289 = vpack.c.b16 %v276, %v275
    %v290 = vpack.c.b16 %v278, %v277
    %v291 = vpack.c.b16 %v280, %v279
    %v292 = vpack.c.b16 %v282, %v281
    %v293 = vpack.c.b16 %v284, %v283
    %v294 = vpack.c.b16 %v286, %v285
    %303 = vmatpush.bf16.msra.mxu0 %v294
    %304 = vmatpush.bf16.msra.mxu0 %v293
    %305 = vmatpush.bf16.msra.mxu0 %v292
    %306 = vmatpush.bf16.msra.mxu0 %v291
    %307 = vmatpush.bf16.msra.mxu0 %v290
    %308 = vmatpush.bf16.msra.mxu0 %v289
    %309 = vmatpush.bf16.msra.mxu0 %v288
    %310 = vmatpush.bf16.msra.mxu0 %v287
    %311 = vmatmul.bf16.gmra.mxu0 %v234
    %v312 = vpop.f32.mrf.mxu0
    %v313 = vadd.f32 %v253, %v312
    %v314 = vpop.f32.mrf.mxu0
    %315 = vdwg.mxu0
    %v316 = vmul.f32 %v313, 0.2
    %v317 = vmax.f32 %v313, %v316
    %v318 = vpack.c.bf16 %v317, %v317
    %319 = vst [vmem:[#allocation8] sm:$0xf] %v318
    // Predicated region
    $region34: #{tpu_custom_call.1} parent=1 // pred_check
      _
    $region35: #{tpu_custom_call.1} parent=1 // pred_check_branch
      %321 = sbr.rel (0) target = $region37
    $region36: #{tpu_custom_call.1} parent=1 // pred_region
      %323 = vsyncadd [#allocation4], 0
      %s325 = sshll.u32 [#allocation8], 4
      %s326 = int_to_ptr.vmem [resolvable:$true] %s325
      %s327 = sshll.u32 %s5, 4
      %s328 = int_to_ptr.hbm [resolvable:$true] %s327
      %330 = dma.vmem_to_hbm [thread:$0]  %s326, 64, %s328, [#allocation4]
    $region37: #{tpu_custom_call.1} parent=1 // pred_fallthru
      _
    // Predicated region
    $region38: #{tpu_custom_call.1} parent=1 // pred_check
      _
    $region39: #{tpu_custom_call.1} parent=1 // pred_check_branch
      %332 = sbr.rel (0) target = $region41
    $region40: #{tpu_custom_call.1} parent=1 // pred_region
      %334 = dma.done [#allocation4], 64
    $region41: #{tpu_custom_call.1} parent=1 // pred_fallthru
      _
    %335 = vsyncpa [#allocation3], 1
    %336 = vsyncpa [#allocation6], 1
    %337 = vsyncpa [#allocation4], 1

// kernel: tpu_custom_call.1
$region0: #{tpu_custom_call.1}
  #allocation0 [shape = 'u32[]', space=smem, size = 0x4, offset = 0x4, fixed_abs, tag = 'smem constant byte address 0x4 - core index']
  #allocation1 [shape = 'u32[72,128]{1,0:T(1,128)}', space=vmem, size = 0x9000, scoped, tag = 'internal scratch']
  %s0 = inlined_call_operand.hbm [shape: bf16[8,256], index: 0, kind: input, shape index: {}]
  %s1 = inlined_call_operand.hbm [shape: bf16[256,128], index: 1, kind: input, shape index: {}]
  %s2 = inlined_call_operand.vmem [shape: f32[1,128], index: 2, kind: input, shape index: {}]
  %s3 = inlined_call_operand.hbm [shape: bf16[128,128], index: 3, kind: input, shape index: {}]
  %s4 = inlined_call_operand.vmem [shape: f32[1,128], index: 4, kind: input, shape index: {}]
  %s5 = inlined_call_operand.hbm [shape: bf16[8,128], index: 5, kind: output, shape index: {}]
  %s6 = sld [smem:[#allocation0]]
  $region42: #{tpu_custom_call.1} parent=0
    _
  %s8 = ssub.s32 1, %s6
  %s9 = scalar_select 0, %s8, %s6
  $region1: #{tpu_custom_call.1} parent=0
    #allocation2 [shape = 'u8[4096]{0}', space=vmem, size = 0x1000, scoped, tag = 'input window, operand 0, single buffered']
    #allocation3 [shape = 's32[1]{0}', space=sflag, size = 0x4, scoped, tag = 'scoped memory for tpu_custom_call.1']
    #allocation4 [shape = 's32[1]{0}', space=sflag, size = 0x4, scoped, tag = 'scoped memory for tpu_custom_call.1']
    #allocation5 [shape = 'u8[65536]{0}', space=vmem, size = 0x10000, scoped, tag = 'input window, operand 1, single buffered']
    #allocation6 [shape = 's32[1]{0}', space=sflag, size = 0x4, scoped, tag = 'scoped memory for tpu_custom_call.1']
    #allocation7 [shape = 'u8[32768]{0}', space=vmem, size = 0x8000, scoped, tag = 'input window, operand 3, single buffered']
    #allocation8 [shape = 'u8[2048]{0}', space=vmem, size = 0x800, scoped, tag = 'output window, operand 0, single buffered']
    %10 = vsyncpa [#allocation3], 0
    %11 = vsyncpa [#allocation6], 0
    %12 = vsyncpa [#allocation4], 0
    // Predicated region
    $region2: #{tpu_custom_call.1} parent=1 // pred_check
      _
    $region3: #{tpu_custom_call.1} parent=1 // pred_check_branch
      %14 = sbr.rel (0) target = $region5
    $region4: #{tpu_custom_call.1} parent=1 // pred_region
      %16 = vsyncadd [#allocation3], 0
      %s18 = sshll.u32 %s0, 4
      %s19 = int_to_ptr.hbm [resolvable:$true] %s18
      %s20 = sshll.u32 [#allocation2], 4
      %s21 = int_to_ptr.vmem [resolvable:$true] %s20
      %23 = dma.hbm_to_vmem [thread:$0]  %s19, 128, %s21, [#allocation3]
    $region5: #{tpu_custom_call.1} parent=1 // pred_fallthru
      _
    // Predicated region
    $region6: #{tpu_custom_call.1} parent=1 // pred_check
      _
    $region7: #{tpu_custom_call.1} parent=1 // pred_check_branch
      %25 = sbr.rel (0) target = $region9
    $region8: #{tpu_custom_call.1} parent=1 // pred_region
      %27 = vsyncadd [#allocation6], 0
      %s28 = sshll.u32 %s1, 4
      %s29 = int_to_ptr.hbm [resolvable:$true] %s28
      %s30 = sshll.u32 [#allocation5], 4
      %s31 = int_to_ptr.vmem [resolvable:$true] %s30
      %36 = dma.hbm_to_vmem [thread:$0]  %s29, 2048, %s31, [#allocation6], 64, 64, 4
    $region9: #{tpu_custom_call.1} parent=1 // pred_fallthru
      _
    // Predicated region
    $region10: #{tpu_custom_call.1} parent=1 // pred_check
      _
    $region11: #{tpu_custom_call.1} parent=1 // pred_check_branch
      %38 = sbr.rel (0) target = $region13
    $region12: #{tpu_custom_call.1} parent=1 // pred_region
      _
    $region13: #{tpu_custom_call.1} parent=1 // pred_fallthru
      _
    // Predicated region
    $region14: #{tpu_custom_call.1} parent=1 // pred_check
      _
    $region15: #{tpu_custom_call.1} parent=1 // pred_check_branch
      %40 = sbr.rel (0) target = $region17
    $region16: #{tpu_custom_call.1} parent=1 // pred_region
      %42 = vsyncadd [#allocation6], 0
      %s43 = sshll.u32 %s3, 4
      %s44 = int_to_ptr.hbm [resolvable:$true] %s43
      %s45 = sshll.u32 [#allocation7], 4
      %s46 = int_to_ptr.vmem [resolvable:$true] %s45
      %51 = dma.hbm_to_vmem [thread:$0]  %s44, 1024, %s46, [#allocation6], 64, 64, 4
    $region17: #{tpu_custom_call.1} parent=1 // pred_fallthru
      _
    // Predicated region
    $region18: #{tpu_custom_call.1} parent=1 // pred_check
      _
    $region19: #{tpu_custom_call.1} parent=1 // pred_check_branch
      %53 = sbr.rel (0) target = $region21
    $region20: #{tpu_custom_call.1} parent=1 // pred_region
      _
    $region21: #{tpu_custom_call.1} parent=1 // pred_fallthru
      _
    // Predicated region
    $region22: #{tpu_custom_call.1} parent=1 // pred_check
      _
    $region23: #{tpu_custom_call.1} parent=1 // pred_check_branch
      %55 = sbr.rel (0) target = $region25
    $region24: #{tpu_custom_call.1} parent=1 // pred_region
      %57 = dma.done [#allocation3], 128
    $region25: #{tpu_custom_call.1} parent=1 // pred_fallthru
      _
    // Predicated region
    $region26: #{tpu_custom_call.1} parent=1 // pred_check
      _
    $region27: #{tpu_custom_call.1} parent=1 // pred_check_branch
      %59 = sbr.rel (0) target = $region29
    $region28: #{tpu_custom_call.1} parent=1 // pred_region
      %61 = dma.done [#allocation6], 2048
    $region29: #{tpu_custom_call.1} parent=1 // pred_fallthru
      _
    // Predicated region
    $region30: #{tpu_custom_call.1} parent=1 // pred_check
      _
    $region31: #{tpu_custom_call.1} parent=1 // pred_check_branch
      %63 = sbr.rel (0) target = $region33
    $region32: #{tpu_custom_call.1} parent=1 // pred_region
      %65 = dma.done [#allocation6], 1024
    $region33: #{tpu_custom_call.1} parent=1 // pred_fallthru
      _
    %v66 = vld [vmem:[#allocation2] sm:$0xff]
    %v67 = vld [vmem:[#allocation5] sm:$0xf]
    %v68 = vld [vmem:[#allocation5 + $0x4] sm:$0xf]
    %v69 = vld [vmem:[#allocation5 + $0x8] sm:$0xf]
    %v70 = vld [vmem:[#allocation5 + $0xc] sm:$0xf]
    %v71 = vld [vmem:[#allocation5 + $0x10] sm:$0xf]
    %v72 = vld [vmem:[#allocation5 + $0x14] sm:$0xf]
    %v73 = vld [vmem:[#allocation5 + $0x18] sm:$0xf]
    %v74 = vld [vmem:[#allocation5 + $0x1c] sm:$0xf]
    %v75 = vld [vmem:[#allocation5 + $0x20] sm:$0xf]
    %v76 = vld [vmem:[#allocation5 + $0x24] sm:$0xf]
    %v77 = vld [vmem:[#allocation5 + $0x28] sm:$0xf]
    %v78 = vld [vmem:[#allocation5 + $0x2c] sm:$0xf]
    %v79 = vld [vmem:[#allocation5 + $0x30] sm:$0xf]
    %v80 = vld [vmem:[#allocation5 + $0x34] sm:$0xf]
    %v81 = vld [vmem:[#allocation5 + $0x38] sm:$0xf]
    %v82 = vld [vmem:[#allocation5 + $0x3c] sm:$0xf]
    %v83 = vld [vmem:[#allocation5 + $0x40] sm:$0xf]
    %v84 = vld [vmem:[#allocation5 + $0x44] sm:$0xf]
    %v85 = vld [vmem:[#allocation5 + $0x48] sm:$0xf]
    %v86 = vld [vmem:[#allocation5 + $0x4c] sm:$0xf]
    %v87 = vld [vmem:[#allocation5 + $0x50] sm:$0xf]
    %v88 = vld [vmem:[#allocation5 + $0x54] sm:$0xf]
    %v89 = vld [vmem:[#allocation5 + $0x58] sm:$0xf]
    %v90 = vld [vmem:[#allocation5 + $0x5c] sm:$0xf]
    %v91 = vld [vmem:[#allocation5 + $0x60] sm:$0xf]
    %v92 = vld [vmem:[#allocation5 + $0x64] sm:$0xf]
    %v93 = vld [vmem:[#allocation5 + $0x68] sm:$0xf]
    %v94 = vld [vmem:[#allocation5 + $0x6c] sm:$0xf]
    %v95 = vld [vmem:[#allocation5 + $0x70] sm:$0xf]
    %v96 = vld [vmem:[#allocation5 + $0x74] sm:$0xf]
    %v97 = vld [vmem:[#allocation5 + $0x78] sm:$0xf]
    %v98 = vld [vmem:[#allocation5 + $0x7c] sm:$0xf]
    %v99 = vld [vmem:[%s2] sm:$0x1]
    %v101 = vperm.slane %v99, 0
    %v104 = vunpack.c.l.b16 %v66
    %v105 = vunpack.c.h.b16 %v66
    %v106 = vpack.c.b16 %v104, %v104
    %v107 = vpack.c.b16 %v105, %v105
    %v142 = vunpack.c.l.b16 %v67
    %v143 = vunpack.c.l.b16 %v68
    %v144 = vunpack.c.l.b16 %v69
    %v145 = vunpack.c.l.b16 %v70
    %v146 = vunpack.c.l.b16 %v71
    %v147 = vunpack.c.l.b16 %v72
    %v148 = vunpack.c.l.b16 %v73
    %v149 = vunpack.c.l.b16 %v74
    %v150 = vunpack.c.l.b16 %v75
    %v151 = vunpack.c.l.b16 %v76
    %v152 = vunpack.c.l.b16 %v77
    %v153 = vunpack.c.l.b16 %v78
    %v154 = vunpack.c.l.b16 %v79
    %v155 = vunpack.c.l.b16 %v80
    %v156 = vunpack.c.l.b16 %v81
    %v157 = vunpack.c.l.b16 %v82
    %v158 = vunpack.c.l.b16 %v83
    %v159 = vunpack.c.l.b16 %v84
    %v160 = vunpack.c.l.b16 %v85
    %v161 = vunpack.c.l.b16 %v86
    %v162 = vunpack.c.l.b16 %v87
    %v163 = vunpack.c.l.b16 %v88
    %v164 = vunpack.c.l.b16 %v89
    %v165 = vunpack.c.l.b16 %v90
    %v166 = vunpack.c.l.b16 %v91
    %v167 = vunpack.c.l.b16 %v92
    %v168 = vunpack.c.l.b16 %v93
    %v169 = vunpack.c.l.b16 %v94
    %v170 = vunpack.c.l.b16 %v95
    %v171 = vunpack.c.l.b16 %v96
    %v172 = vunpack.c.l.b16 %v97
    %v173 = vunpack.c.l.b16 %v98
    %v174 = vpack.c.b16 %v143, %v142
    %v175 = vpack.c.b16 %v145, %v144
    %v176 = vpack.c.b16 %v147, %v146
    %v177 = vpack.c.b16 %v149, %v148
    %v178 = vpack.c.b16 %v151, %v150
    %v179 = vpack.c.b16 %v153, %v152
    %v180 = vpack.c.b16 %v155, %v154
    %v181 = vpack.c.b16 %v157, %v156
    %v182 = vpack.c.b16 %v159, %v158
    %v183 = vpack.c.b16 %v161, %v160
    %v184 = vpack.c.b16 %v163, %v162
    %v185 = vpack.c.b16 %v165, %v164
    %v186 = vpack.c.b16 %v167, %v166
    %v187 = vpack.c.b16 %v169, %v168
    %v188 = vpack.c.b16 %v171, %v170
    %v189 = vpack.c.b16 %v173, %v172
    %206 = vmatpush.bf16.msra.mxu0 %v181
    %207 = vmatpush.bf16.msra.mxu0 %v180
    %208 = vmatpush.bf16.msra.mxu0 %v179
    %209 = vmatpush.bf16.msra.mxu0 %v178
    %210 = vmatpush.bf16.msra.mxu0 %v177
    %211 = vmatpush.bf16.msra.mxu0 %v176
    %212 = vmatpush.bf16.msra.mxu0 %v175
    %213 = vmatpush.bf16.msra.mxu0 %v174
    %214 = vmatmul.bf16.gmra.mxu0 %v106
    %v215 = vpop.f32.mrf.mxu0
    %v216 = vadd.f32 %v101, %v215
    %v217 = vpop.f32.mrf.mxu0
    %218 = vdwg.mxu0
    %219 = vmatpush.bf16.msra.mxu0 %v189
    %220 = vmatpush.bf16.msra.mxu0 %v188
    %221 = vmatpush.bf16.msra.mxu0 %v187
    %222 = vmatpush.bf16.msra.mxu0 %v186
    %223 = vmatpush.bf16.msra.mxu0 %v185
    %224 = vmatpush.bf16.msra.mxu0 %v184
    %225 = vmatpush.bf16.msra.mxu0 %v183
    %226 = vmatpush.bf16.msra.mxu0 %v182
    %227 = vmatmul.bf16.gmra.mxu0 %v107
    %v228 = vpop.f32.mrf.mxu0
    %v229 = vadd.f32 %v216, %v228
    %v230 = vpop.f32.mrf.mxu0
    %231 = vdwg.mxu0
    %v232 = vmul.f32 %v229, 0.2
    %v233 = vmax.f32 %v229, %v232
    %v234 = vpack.c.bf16 %v233, %v233
    %v235 = vld [vmem:[#allocation7] sm:$0xf]
    %v236 = vld [vmem:[#allocation7 + $0x4] sm:$0xf]
    %v237 = vld [vmem:[#allocation7 + $0x8] sm:$0xf]
    %v238 = vld [vmem:[#allocation7 + $0xc] sm:$0xf]
    %v239 = vld [vmem:[#allocation7 + $0x10] sm:$0xf]
    %v240 = vld [vmem:[#allocation7 + $0x14] sm:$0xf]
    %v241 = vld [vmem:[#allocation7 + $0x18] sm:$0xf]
    %v242 = vld [vmem:[#allocation7 + $0x1c] sm:$0xf]
    %v243 = vld [vmem:[#allocation7 + $0x20] sm:$0xf]
    %v244 = vld [vmem:[#allocation7 + $0x24] sm:$0xf]
    %v245 = vld [vmem:[#allocation7 + $0x28] sm:$0xf]
    %v246 = vld [vmem:[#allocation7 + $0x2c] sm:$0xf]
    %v247 = vld [vmem:[#allocation7 + $0x30] sm:$0xf]
    %v248 = vld [vmem:[#allocation7 + $0x34] sm:$0xf]
    %v249 = vld [vmem:[#allocation7 + $0x38] sm:$0xf]
    %v250 = vld [vmem:[#allocation7 + $0x3c] sm:$0xf]
    %v251 = vld [vmem:[%s4] sm:$0x1]
    %v253 = vperm.slane %v251, 0
    %v271 = vunpack.c.l.b16 %v235
    %v272 = vunpack.c.l.b16 %v236
    %v273 = vunpack.c.l.b16 %v237
    %v274 = vunpack.c.l.b16 %v238
    %v275 = vunpack.c.l.b16 %v239
    %v276 = vunpack.c.l.b16 %v240
    %v277 = vunpack.c.l.b16 %v241
    %v278 = vunpack.c.l.b16 %v242
    %v279 = vunpack.c.l.b16 %v243
    %v280 = vunpack.c.l.b16 %v244
    %v281 = vunpack.c.l.b16 %v245
    %v282 = vunpack.c.l.b16 %v246
    %v283 = vunpack.c.l.b16 %v247
    %v284 = vunpack.c.l.b16 %v248
    %v285 = vunpack.c.l.b16 %v249
    %v286 = vunpack.c.l.b16 %v250
    %v287 = vpack.c.b16 %v272, %v271
    %v288 = vpack.c.b16 %v274, %v273
    %v289 = vpack.c.b16 %v276, %v275
    %v290 = vpack.c.b16 %v278, %v277
    %v291 = vpack.c.b16 %v280, %v279
    %v292 = vpack.c.b16 %v282, %v281
    %v293 = vpack.c.b16 %v284, %v283
    %v294 = vpack.c.b16 %v286, %v285
    %303 = vmatpush.bf16.msra.mxu0 %v294
    %304 = vmatpush.bf16.msra.mxu0 %v293
    %305 = vmatpush.bf16.msra.mxu0 %v292
    %306 = vmatpush.bf16.msra.mxu0 %v291
    %307 = vmatpush.bf16.msra.mxu0 %v290
    %308 = vmatpush.bf16.msra.mxu0 %v289
    %309 = vmatpush.bf16.msra.mxu0 %v288
    %310 = vmatpush.bf16.msra.mxu0 %v287
    %311 = vmatmul.bf16.gmra.mxu0 %v234
    %v312 = vpop.f32.mrf.mxu0
    %v313 = vadd.f32 %v253, %v312
    %v314 = vpop.f32.mrf.mxu0
    %315 = vdwg.mxu0
    %v316 = vmul.f32 %v313, 0.2
    %v317 = vmax.f32 %v313, %v316
    %v318 = vpack.c.bf16 %v317, %v317
    %319 = vst [vmem:[#allocation8] sm:$0xf] %v318
    // Predicated region
    $region34: #{tpu_custom_call.1} parent=1 // pred_check
      _
    $region35: #{tpu_custom_call.1} parent=1 // pred_check_branch
      %321 = sbr.rel (0) target = $region37
    $region36: #{tpu_custom_call.1} parent=1 // pred_region
      %323 = vsyncadd [#allocation4], 0
      %s325 = sshll.u32 [#allocation8], 4
      %s326 = int_to_ptr.vmem [resolvable:$true] %s325
      %s327 = sshll.u32 %s5, 4
      %s328 = int_to_ptr.hbm [resolvable:$true] %s327
      %330 = dma.vmem_to_hbm [thread:$0]  %s326, 64, %s328, [#allocation4]
    $region37: #{tpu_custom_call.1} parent=1 // pred_fallthru
      _
    // Predicated region
    $region38: #{tpu_custom_call.1} parent=1 // pred_check
      _
    $region39: #{tpu_custom_call.1} parent=1 // pred_check_branch
      %332 = sbr.rel (0) target = $region41
    $region40: #{tpu_custom_call.1} parent=1 // pred_region
      %334 = dma.done [#allocation4], 64
    $region41: #{tpu_custom_call.1} parent=1 // pred_fallthru
      _
    %335 = vsyncpa [#allocation3], 1
    %336 = vsyncpa [#allocation6], 1
    %337 = vsyncpa [#allocation4], 1

</llo_original>
